<compile_context>
chip_gen: v7x
topology: tpu7x:2x2x1
jax: 0.10.0
libtpu: 0.0.40
codegen_flags: <defaults>
</compile_context>

<pallas_src>
import jax
import jax.numpy as jnp
from jax.experimental import pallas as pl
from jax.experimental.pallas import tpu as pltpu


def attention_kernel(pq_ref, mem_ref, pm_ref, awc0_ref, awc1_ref, bias_ref,
                     wcomb_ref, v_ref, ctx_ref, w_ref):
    pq = pq_ref[...]              # (BB, 1, A)   hoisted query projection
    pm = pm_ref[...]              # (BB, T, A)   processed memory
    awc0 = awc0_ref[...]          # (BB, Tp, 1)  conv input, channel 0 (padded)
    awc1 = awc1_ref[...]          # (BB, Tp, 1)  conv input, channel 1 (padded)
    wcomb = wcomb_ref[...]        # (2K, A)      fused conv+dense weights (row = 2k+c)

    BB, T, A = pm.shape
    K = wcomb.shape[0] // 2

    # ---- fused location conv + location dense (pure VPU broadcast MACs) ----
    # ploc[b, t, :] = sum_{k,c} awc_c[b, t+k] * Wcomb[2k+c, :]
    ploc = (awc0[:, 0:T, :] * wcomb[None, 0:1, :]
            + awc1[:, 0:T, :] * wcomb[None, 1:2, :])
    for k in range(1, K):                                  # static unroll over taps
        ploc = (ploc
                + awc0[:, k:k + T, :] * wcomb[None, 2 * k:2 * k + 1, :]
                + awc1[:, k:k + T, :] * wcomb[None, 2 * k + 1:2 * k + 2, :])

    # ---- alignment pre-activation ----
    pre = jnp.tanh(pq + ploc + pm)                         # (BB, T, A)

    # ---- energies, lane-major (T on lanes) ----
    v_b = jnp.broadcast_to(v_ref[...], (BB, 1, A))         # (BB, 1, A)
    energies = jnp.einsum('bxa,bta->bxt', v_b, pre,
                          preferred_element_type=jnp.float32)   # (BB, 1, T)
    energies = energies + bias_ref[...]                    # additive mask bias

    # ---- softmax along lanes (T) ----
    m = jnp.max(energies, axis=-1, keepdims=True)          # (BB, 1, 1)
    e = jnp.exp(energies - m)
    s = jnp.sum(e, axis=-1, keepdims=True)
    w = e / s                                              # (BB, 1, T)

    w_ref[...] = w                                         # lane-dense store

    # ---- attention context: batched (1,T) @ (T,E) on the MXU ----
    ctx_ref[...] = jnp.einsum('bxt,bte->bxe', w, mem_ref[...],
                              preferred_element_type=jnp.float32)  # (BB, 1, E)


@jax.jit
def attention_forward(wq, wconv_r, wld, v, query, memory, processed_memory,
                      attention_weights_cat, mask):
    """query (B,D), memory (B,T,E), processed_memory (B,T,A),
    attention_weights_cat (B,2,T), mask (B,T) bool.
    Returns context (B,E), attention_weights (B,T)."""
    B, T, E = memory.shape
    A = wq.shape[1]
    K = wconv_r.shape[0]
    assert K % 2 == 1, "'same' padding conv requires odd kernel size"
    pad = (K - 1) // 2
    Tp = T + 2 * pad
    f32 = jnp.float32

    # ---- hoisted, well-shaped XLA prep ----
    pq = (query.astype(f32) @ wq.astype(f32))[:, None, :]             # (B, 1, A)
    wcomb = jnp.einsum('kcf,fa->kca', wconv_r.astype(f32),
                       wld.astype(f32)).reshape(2 * K, A)             # (2K, A)
    awc = jnp.pad(attention_weights_cat.astype(f32),
                  ((0, 0), (0, 0), (pad, pad)))                       # (B, 2, Tp)
    awc0 = awc[:, 0, :, None]                                         # (B, Tp, 1)
    awc1 = awc[:, 1, :, None]                                         # (B, Tp, 1)
    bias = jnp.where(mask, f32(-1e30), f32(0.0))[:, None, :]          # (B, 1, T)
    mem = memory.astype(f32)
    pm = processed_memory.astype(f32)
    v2 = v.astype(f32).reshape(1, A)

    # ---- batch blocking: amortize per-grid-step overhead over up to 8 rows ----
    # (for production B this also leaves >=2 parallel grid steps for v7x megacore)
    BB = min(B, 8)
    nblk = -(-B // BB)
    Bp = nblk * BB
    if Bp != B:
        pb = lambda x: jnp.pad(x, ((0, Bp - B),) + ((0, 0),) * (x.ndim - 1))
        pq, mem, pm, awc0, awc1, bias = (pb(t) for t in
                                         (pq, mem, pm, awc0, awc1, bias))

    def batch_spec(shape):
        return pl.BlockSpec((BB,) + shape, lambda i: (i, 0, 0))

    ctx, w = pl.pallas_call(
        attention_kernel,
        out_shape=(jax.ShapeDtypeStruct((Bp, 1, E), f32),
                   jax.ShapeDtypeStruct((Bp, 1, T), f32)),
        grid=(nblk,),
        in_specs=[
            batch_spec((1, A)),                           # pq (hoisted query proj)
            batch_spec((T, E)),                           # memory
            batch_spec((T, A)),                           # processed_memory
            batch_spec((Tp, 1)),                          # awc channel 0 (padded)
            batch_spec((Tp, 1)),                          # awc channel 1 (padded)
            batch_spec((1, T)),                           # additive mask bias
            pl.BlockSpec((2 * K, A), lambda i: (0, 0)),   # fused conv+dense weights
            pl.BlockSpec((1, A), lambda i: (0, 0)),       # v
        ],
        out_specs=(
            batch_spec((1, E)),                           # context
            batch_spec((1, T)),                           # attention weights (lane-major)
        ),
        compiler_params=pltpu.CompilerParams(
            dimension_semantics=("parallel",)),
    )(pq, mem, pm, awc0, awc1, bias, wcomb, v2)

    return ctx[:B, 0, :], w[:B, 0, :]


def reference_forward(wq, wconv_torch, wld, v, query, memory,
                      processed_memory, attention_weights_cat, mask):
    """Pure-JAX reference mirroring the PyTorch module."""
    K = wconv_torch.shape[2]
    pad = (K - 1) // 2
    pq = query[:, None, :] @ wq                               # (B, 1, A)
    loc = jax.lax.conv_general_dilated(
        attention_weights_cat, wconv_torch, (1,), [(pad, pad)],
        dimension_numbers=('NCH', 'OIH', 'NCH'))              # (B, F, T)
    ploc = jnp.transpose(loc, (0, 2, 1)) @ wld                # (B, T, A)
    energies = jnp.sum(jnp.tanh(pq + ploc + processed_memory) * v[None],
                       axis=-1)                               # (B, T)
    energies = jnp.where(mask, -jnp.inf, energies)
    w = jax.nn.softmax(energies, axis=1)
    ctx = jnp.einsum('bt,bte->be', w, memory)
    return ctx, w


def xavier_uniform(key, shape, fan_in, fan_out, gain=1.0):
    bound = gain * (6.0 / (fan_in + fan_out)) ** 0.5
    return jax.random.uniform(key, shape, jnp.float32, -bound, bound)


if __name__ == "__main__":
    # sizes: embedding_dim=32, attention_rnn_dim=32, attention_dim=64,
    #        attention_location_n_filters=8, attention_location_kernel_size=3
    B, T = 2, 16
    E, D, A, nF, K = 32, 32, 64, 8, 3
    tanh_gain = 5.0 / 3.0

    keys = jax.random.split(jax.random.PRNGKey(0), 8)

    # parameters (PyTorch-equivalent shapes, stored transposed where convenient)
    wm = xavier_uniform(keys[0], (E, A), E, A, tanh_gain)          # memory_layer.W^T
    wq = xavier_uniform(keys[1], (D, A), D, A, tanh_gain)          # query_layer.W^T
    wconv_torch = xavier_uniform(keys[2], (nF, 2, K), 2 * K, nF)   # Conv1d weight (O,I,K)
    wconv_r = jnp.transpose(wconv_torch, (2, 1, 0))                # (K, 2, nF)
    wld = xavier_uniform(keys[3], (nF, A), nF, A, tanh_gain)       # location_dense.W^T
    v = xavier_uniform(keys[4], (1, A), A, 1)                      # v.W

    # inputs
    query = jax.random.normal(keys[5], (B, D), jnp.float32)
    memory = jax.random.normal(keys[6], (B, T, E), jnp.float32)
    attention_weights_cat = jax.random.uniform(keys[7], (B, 2, T), jnp.float32)
    processed_memory = memory @ wm                                 # forward_memory()
    lengths = jnp.array([T, T - 4], dtype=jnp.int32)
    mask = jnp.arange(T)[None, :] >= lengths[:, None]              # (B, T) bool

    ctx, w = attention_forward(wq, wconv_r, wld, v, query, memory,
                               processed_memory, attention_weights_cat, mask)
    jax.block_until_ready((ctx, w))

    ctx_exp, w_exp = reference_forward(wq, wconv_torch, wld, v, query, memory,
                                       processed_memory, attention_weights_cat,
                                       mask)
    assert ctx.shape == (B, E) and w.shape == (B, T)
    assert jnp.allclose(ctx, ctx_exp, rtol=1e-4, atol=1e-4)
    assert jnp.allclose(w, w_exp, rtol=1e-4, atol=1e-4)

    print("KERNEL_OK")
</pallas_src>

<mosaic_0001>
module attributes {stable_mosaic.version = 11 : i64} {
  func.func @attention_kernel(%arg0: i32, %arg1: memref<2x1x64xf32, #tpu.memory_space<vmem>>, %arg2: memref<2x16x32xf32, #tpu.memory_space<vmem>>, %arg3: memref<2x16x64xf32, #tpu.memory_space<vmem>>, %arg4: memref<2x18x1xf32, #tpu.memory_space<vmem>>, %arg5: memref<2x18x1xf32, #tpu.memory_space<vmem>>, %arg6: memref<2x1x16xf32, #tpu.memory_space<vmem>>, %arg7: memref<6x64xf32, #tpu.memory_space<vmem>>, %arg8: memref<1x64xf32, #tpu.memory_space<vmem>>, %arg9: memref<2x1x32xf32, #tpu.memory_space<vmem>>, %arg10: memref<2x1x16xf32, #tpu.memory_space<vmem>>) attributes {dimension_semantics = [#tpu.dimension_semantics<parallel>], iteration_bounds = array<i64: 1>, scalar_prefetch = 0 : i64, scratch_operands = 0 : i64, tpu.core_type = #tpu.core_type<tc>, window_params = [{transform_indices = @transform_0, window_bounds = array<i64: 2, 1, 64>}, {transform_indices = @transform_1, window_bounds = array<i64: 2, 16, 32>}, {transform_indices = @transform_2, window_bounds = array<i64: 2, 16, 64>}, {transform_indices = @transform_3, window_bounds = array<i64: 2, 18, 1>}, {transform_indices = @transform_4, window_bounds = array<i64: 2, 18, 1>}, {transform_indices = @transform_5, window_bounds = array<i64: 2, 1, 16>}, {pipeline_mode = #tpu.pipeline_mode<synchronous>, transform_indices = @transform_6, window_bounds = array<i64: 6, 64>}, {pipeline_mode = #tpu.pipeline_mode<synchronous>, transform_indices = @transform_7, window_bounds = array<i64: 1, 64>}, {transform_indices = @transform_8, window_bounds = array<i64: 2, 1, 32>}, {transform_indices = @transform_9, window_bounds = array<i64: 2, 1, 16>}]} {
    %c0 = arith.constant 0 : index
    %c0_0 = arith.constant 0 : index
    %c0_1 = arith.constant 0 : index
    %0 = vector.load %arg1[%c0, %c0_0, %c0_1] : memref<2x1x64xf32, #tpu.memory_space<vmem>>, vector<2x1x64xf32>
    %c0_2 = arith.constant 0 : index
    %c0_3 = arith.constant 0 : index
    %c0_4 = arith.constant 0 : index
    %1 = vector.load %arg3[%c0_2, %c0_3, %c0_4] : memref<2x16x64xf32, #tpu.memory_space<vmem>>, vector<2x16x64xf32>
    %c0_5 = arith.constant 0 : index
    %c0_6 = arith.constant 0 : index
    %c0_7 = arith.constant 0 : index
    %2 = vector.load %arg4[%c0_5, %c0_6, %c0_7] : memref<2x18x1xf32, #tpu.memory_space<vmem>>, vector<2x18x1xf32>
    %c0_8 = arith.constant 0 : index
    %c0_9 = arith.constant 0 : index
    %c0_10 = arith.constant 0 : index
    %3 = vector.load %arg5[%c0_8, %c0_9, %c0_10] : memref<2x18x1xf32, #tpu.memory_space<vmem>>, vector<2x18x1xf32>
    %c0_11 = arith.constant 0 : index
    %c0_12 = arith.constant 0 : index
    %4 = vector.load %arg7[%c0_11, %c0_12] : memref<6x64xf32, #tpu.memory_space<vmem>>, vector<6x64xf32>
    %5 = vector.extract_strided_slice %2 {offsets = [0, 0, 0], sizes = [2, 16, 1], strides = [1, 1, 1]} : vector<2x18x1xf32> to vector<2x16x1xf32>
    %6 = vector.extract_strided_slice %4 {offsets = [0, 0], sizes = [1, 64], strides = [1, 1]} : vector<6x64xf32> to vector<1x64xf32>
    %7 = vector.shape_cast %6 : vector<1x64xf32> to vector<1x1x64xf32>
    %8 = vector.broadcast %5 : vector<2x16x1xf32> to vector<2x16x64xf32>
    %9 = vector.broadcast %7 : vector<1x1x64xf32> to vector<2x16x64xf32>
    %10 = arith.mulf %8, %9 : vector<2x16x64xf32>
    %11 = vector.extract_strided_slice %3 {offsets = [0, 0, 0], sizes = [2, 16, 1], strides = [1, 1, 1]} : vector<2x18x1xf32> to vector<2x16x1xf32>
    %12 = vector.extract_strided_slice %4 {offsets = [1, 0], sizes = [1, 64], strides = [1, 1]} : vector<6x64xf32> to vector<1x64xf32>
    %13 = vector.shape_cast %12 : vector<1x64xf32> to vector<1x1x64xf32>
    %14 = vector.broadcast %11 : vector<2x16x1xf32> to vector<2x16x64xf32>
    %15 = vector.broadcast %13 : vector<1x1x64xf32> to vector<2x16x64xf32>
    %16 = arith.mulf %14, %15 : vector<2x16x64xf32>
    %17 = arith.addf %10, %16 : vector<2x16x64xf32>
    %18 = vector.extract_strided_slice %2 {offsets = [0, 1, 0], sizes = [2, 16, 1], strides = [1, 1, 1]} : vector<2x18x1xf32> to vector<2x16x1xf32>
    %19 = vector.extract_strided_slice %4 {offsets = [2, 0], sizes = [1, 64], strides = [1, 1]} : vector<6x64xf32> to vector<1x64xf32>
    %20 = vector.shape_cast %19 : vector<1x64xf32> to vector<1x1x64xf32>
    %21 = vector.broadcast %18 : vector<2x16x1xf32> to vector<2x16x64xf32>
    %22 = vector.broadcast %20 : vector<1x1x64xf32> to vector<2x16x64xf32>
    %23 = arith.mulf %21, %22 : vector<2x16x64xf32>
    %24 = arith.addf %17, %23 : vector<2x16x64xf32>
    %25 = vector.extract_strided_slice %3 {offsets = [0, 1, 0], sizes = [2, 16, 1], strides = [1, 1, 1]} : vector<2x18x1xf32> to vector<2x16x1xf32>
    %26 = vector.extract_strided_slice %4 {offsets = [3, 0], sizes = [1, 64], strides = [1, 1]} : vector<6x64xf32> to vector<1x64xf32>
    %27 = vector.shape_cast %26 : vector<1x64xf32> to vector<1x1x64xf32>
    %28 = vector.broadcast %25 : vector<2x16x1xf32> to vector<2x16x64xf32>
    %29 = vector.broadcast %27 : vector<1x1x64xf32> to vector<2x16x64xf32>
    %30 = arith.mulf %28, %29 : vector<2x16x64xf32>
    %31 = arith.addf %24, %30 : vector<2x16x64xf32>
    %32 = vector.extract_strided_slice %2 {offsets = [0, 2, 0], sizes = [2, 16, 1], strides = [1, 1, 1]} : vector<2x18x1xf32> to vector<2x16x1xf32>
    %33 = vector.extract_strided_slice %4 {offsets = [4, 0], sizes = [1, 64], strides = [1, 1]} : vector<6x64xf32> to vector<1x64xf32>
    %34 = vector.shape_cast %33 : vector<1x64xf32> to vector<1x1x64xf32>
    %35 = vector.broadcast %32 : vector<2x16x1xf32> to vector<2x16x64xf32>
    %36 = vector.broadcast %34 : vector<1x1x64xf32> to vector<2x16x64xf32>
    %37 = arith.mulf %35, %36 : vector<2x16x64xf32>
    %38 = arith.addf %31, %37 : vector<2x16x64xf32>
    %39 = vector.extract_strided_slice %3 {offsets = [0, 2, 0], sizes = [2, 16, 1], strides = [1, 1, 1]} : vector<2x18x1xf32> to vector<2x16x1xf32>
    %40 = vector.extract_strided_slice %4 {offsets = [5, 0], sizes = [1, 64], strides = [1, 1]} : vector<6x64xf32> to vector<1x64xf32>
    %41 = vector.shape_cast %40 : vector<1x64xf32> to vector<1x1x64xf32>
    %42 = vector.broadcast %39 : vector<2x16x1xf32> to vector<2x16x64xf32>
    %43 = vector.broadcast %41 : vector<1x1x64xf32> to vector<2x16x64xf32>
    %44 = arith.mulf %42, %43 : vector<2x16x64xf32>
    %45 = arith.addf %38, %44 : vector<2x16x64xf32>
    %46 = vector.broadcast %0 : vector<2x1x64xf32> to vector<2x16x64xf32>
    %47 = arith.addf %46, %45 : vector<2x16x64xf32>
    %48 = arith.addf %47, %1 : vector<2x16x64xf32>
    %49 = math.tanh %48 : vector<2x16x64xf32>
    %c0_13 = arith.constant 0 : index
    %c0_14 = arith.constant 0 : index
    %50 = vector.load %arg8[%c0_13, %c0_14] : memref<1x64xf32, #tpu.memory_space<vmem>>, vector<1x64xf32>
    %51 = vector.shape_cast %50 : vector<1x64xf32> to vector<1x1x64xf32>
    %52 = vector.broadcast %51 : vector<1x1x64xf32> to vector<2x1x64xf32>
    "tpu.trace_start"() <{level = 10 : i32, message = "bxa,bta->bxt"}> : () -> ()
    %cst = arith.constant dense<0.000000e+00> : vector<2x1x16xf32>
    %53 = tpu.matmul %52, %49, %cst {dimension_numbers = #tpu.dot_dimension_numbers<[2], [2], [1], [1], [0, 0, 0, 1, 1, 1], [0], [0]>} : vector<2x1x64xf32>, vector<2x16x64xf32>, vector<2x1x16xf32> -> vector<2x1x16xf32>
    "tpu.trace_stop"() : () -> ()
    %c0_15 = arith.constant 0 : index
    %c0_16 = arith.constant 0 : index
    %c0_17 = arith.constant 0 : index
    %54 = vector.load %arg6[%c0_15, %c0_16, %c0_17] : memref<2x1x16xf32, #tpu.memory_space<vmem>>, vector<2x1x16xf32>
    %55 = arith.addf %53, %54 : vector<2x1x16xf32>
    %cst_18 = arith.constant dense<0xFF800000> : vector<2x1xf32>
    %56 = vector.multi_reduction <maximumf>, %55, %cst_18 [2] : vector<2x1x16xf32> to vector<2x1xf32>
    %57 = vector.shape_cast %56 : vector<2x1xf32> to vector<2x1x1xf32>
    %58 = vector.broadcast %57 : vector<2x1x1xf32> to vector<2x1x16xf32>
    %59 = arith.subf %55, %58 : vector<2x1x16xf32>
    %60 = math.exp %59 : vector<2x1x16xf32>
    %cst_19 = arith.constant dense<0.000000e+00> : vector<2x1xf32>
    %61 = vector.multi_reduction <add>, %60, %cst_19 [2] : vector<2x1x16xf32> to vector<2x1xf32>
    %62 = vector.shape_cast %61 : vector<2x1xf32> to vector<2x1x1xf32>
    %63 = vector.broadcast %62 : vector<2x1x1xf32> to vector<2x1x16xf32>
    %64 = arith.divf %60, %63 : vector<2x1x16xf32>
    %c0_20 = arith.constant 0 : index
    %c0_21 = arith.constant 0 : index
    %c0_22 = arith.constant 0 : index
    %65 = vector.load %arg10[%c0_20, %c0_21, %c0_22] : memref<2x1x16xf32, #tpu.memory_space<vmem>>, vector<2x1x16xf32>
    tpu.vector_store %arg10[%c0_20, %c0_21, %c0_22], %64 {strides = array<i32>} : memref<2x1x16xf32, #tpu.memory_space<vmem>>, vector<2x1x16xf32>,
    %c0_23 = arith.constant 0 : index
    %c0_24 = arith.constant 0 : index
    %c0_25 = arith.constant 0 : index
    %66 = vector.load %arg2[%c0_23, %c0_24, %c0_25] : memref<2x16x32xf32, #tpu.memory_space<vmem>>, vector<2x16x32xf32>
    "tpu.trace_start"() <{level = 10 : i32, message = "bxt,bte->bxe"}> : () -> ()
    %cst_26 = arith.constant dense<0.000000e+00> : vector<2x1x32xf32>
    %67 = tpu.matmul %64, %66, %cst_26 {dimension_numbers = #tpu.dot_dimension_numbers<[2], [1], [1], [2], [0, 0, 0, 1, 1, 2], [0], [0]>} : vector<2x1x16xf32>, vector<2x16x32xf32>, vector<2x1x32xf32> -> vector<2x1x32xf32>
    "tpu.trace_stop"() : () -> ()
    %c0_27 = arith.constant 0 : index
    %c0_28 = arith.constant 0 : index
    %c0_29 = arith.constant 0 : index
    %68 = vector.load %arg9[%c0_27, %c0_28, %c0_29] : memref<2x1x32xf32, #tpu.memory_space<vmem>>, vector<2x1x32xf32>
    tpu.vector_store %arg9[%c0_27, %c0_28, %c0_29], %67 {strides = array<i32>} : memref<2x1x32xf32, #tpu.memory_space<vmem>>, vector<2x1x32xf32>,
    return
  }
  func.func @transform_0(%arg0: i32) -> (i32, i32, i32) {
    %c0_i32 = arith.constant 0 : i32
    %c0_i32_0 = arith.constant 0 : i32
    %c0_i32_1 = arith.constant 0 : i32
    return %arg0, %c0_i32, %c0_i32_0 : i32, i32, i32
  }
  func.func @transform_1(%arg0: i32) -> (i32, i32, i32) {
    %c0_i32 = arith.constant 0 : i32
    %c0_i32_0 = arith.constant 0 : i32
    %c0_i32_1 = arith.constant 0 : i32
    return %arg0, %c0_i32, %c0_i32_0 : i32, i32, i32
  }
  func.func @transform_2(%arg0: i32) -> (i32, i32, i32) {
    %c0_i32 = arith.constant 0 : i32
    %c0_i32_0 = arith.constant 0 : i32
    %c0_i32_1 = arith.constant 0 : i32
    return %arg0, %c0_i32, %c0_i32_0 : i32, i32, i32
  }
  func.func @transform_3(%arg0: i32) -> (i32, i32, i32) {
    %c0_i32 = arith.constant 0 : i32
    %c0_i32_0 = arith.constant 0 : i32
    %c0_i32_1 = arith.constant 0 : i32
    return %arg0, %c0_i32, %c0_i32_0 : i32, i32, i32
  }
  func.func @transform_4(%arg0: i32) -> (i32, i32, i32) {
    %c0_i32 = arith.constant 0 : i32
    %c0_i32_0 = arith.constant 0 : i32
    %c0_i32_1 = arith.constant 0 : i32
    return %arg0, %c0_i32, %c0_i32_0 : i32, i32, i32
  }
  func.func @transform_5(%arg0: i32) -> (i32, i32, i32) {
    %c0_i32 = arith.constant 0 : i32
    %c0_i32_0 = arith.constant 0 : i32
    %c0_i32_1 = arith.constant 0 : i32
    return %arg0, %c0_i32, %c0_i32_0 : i32, i32, i32
  }
  func.func @transform_6(%arg0: i32) -> (i32, i32) {
    %c0_i32 = arith.constant 0 : i32
    %c0_i32_0 = arith.constant 0 : i32
    %c0_i32_1 = arith.constant 0 : i32
    return %c0_i32, %c0_i32_0 : i32, i32
  }
  func.func @transform_7(%arg0: i32) -> (i32, i32) {
    %c0_i32 = arith.constant 0 : i32
    %c0_i32_0 = arith.constant 0 : i32
    %c0_i32_1 = arith.constant 0 : i32
    return %c0_i32, %c0_i32_0 : i32, i32
  }
  func.func @transform_8(%arg0: i32) -> (i32, i32, i32) {
    %c0_i32 = arith.constant 0 : i32
    %c0_i32_0 = arith.constant 0 : i32
    %c0_i32_1 = arith.constant 0 : i32
    return %arg0, %c0_i32, %c0_i32_0 : i32, i32, i32
  }
  func.func @transform_9(%arg0: i32) -> (i32, i32, i32) {
    %c0_i32 = arith.constant 0 : i32
    %c0_i32_0 = arith.constant 0 : i32
    %c0_i32_1 = arith.constant 0 : i32
    return %arg0, %c0_i32, %c0_i32_0 : i32, i32, i32
  }
}

</mosaic_0001>

<llo_original>
// kernel: attention_forward.1
$region0: #{attention_forward.1}
  #allocation0 [shape = 'u32[]', space=smem, size = 0x4, offset = 0x4, fixed_abs, tag = 'smem constant byte address 0x4 - core index']
  #allocation1 [shape = 'u32[144,128]{1,0:T(1,128)}', space=vmem, size = 0x12000, scoped, tag = 'internal scratch']
  %s0 = inlined_call_operand.vmem [shape: f32[2,1,64], index: 0, kind: input, shape index: {}]
  %s1 = inlined_call_operand.vmem [shape: f32[2,16,32], index: 1, kind: input, shape index: {}]
  %s2 = inlined_call_operand.vmem [shape: f32[2,16,64], index: 2, kind: input, shape index: {}]
  %s3 = inlined_call_operand.vmem [shape: f32[2,18,1], index: 3, kind: input, shape index: {}]
  %s4 = inlined_call_operand.vmem [shape: f32[2,18,1], index: 4, kind: input, shape index: {}]
  %s5 = inlined_call_operand.vmem [shape: f32[2,1,16], index: 5, kind: input, shape index: {}]
  %s6 = inlined_call_operand.vmem [shape: f32[6,64], index: 6, kind: input, shape index: {}]
  %s7 = inlined_call_operand.vmem [shape: f32[1,64], index: 7, kind: input, shape index: {}]
  %s8 = inlined_call_operand.hbm [shape: f32[2,1,32], index: 8, kind: output, shape index: {0}]
  %s9 = inlined_call_operand.hbm [shape: f32[2,1,16], index: 9, kind: output, shape index: {1}]
  %10 = xla_tuple %s8, %s9
  %s11 = sld [smem:[#allocation0]]
  $region50: #{attention_forward.1} parent=0
    _
  %s13 = ssub.s32 1, %s11
  %s14 = scalar_select 0, %s13, %s11
  $region1: #{attention_forward.1} parent=0
    #allocation2 [shape = 'u8[1024]{0}', space=vmem, size = 0x400, scoped, tag = 'output window, operand 0, single buffered']
    #allocation3 [shape = 's32[1]{0}', space=sflag, size = 0x4, scoped, tag = 'scoped memory for attention_forward.1']
    #allocation4 [shape = 'u8[1024]{0}', space=vmem, size = 0x400, scoped, tag = 'output window, operand 1, single buffered']
    #allocation5 [shape = 's32[1]{0}', space=sflag, size = 0x4, scoped, tag = 'scoped memory for attention_forward.1']
    %15 = vsyncpa [#allocation3], 0
    %16 = vsyncpa [#allocation5], 0
    // Predicated region
    $region2: #{attention_forward.1} parent=1 // pred_check
      _
    $region3: #{attention_forward.1} parent=1 // pred_check_branch
      %18 = sbr.rel (0) target = $region5
    $region4: #{attention_forward.1} parent=1 // pred_region
      _
    $region5: #{attention_forward.1} parent=1 // pred_fallthru
      _
    // Predicated region
    $region6: #{attention_forward.1} parent=1 // pred_check
      _
    $region7: #{attention_forward.1} parent=1 // pred_check_branch
      %20 = sbr.rel (0) target = $region9
    $region8: #{attention_forward.1} parent=1 // pred_region
      _
    $region9: #{attention_forward.1} parent=1 // pred_fallthru
      _
    // Predicated region
    $region10: #{attention_forward.1} parent=1 // pred_check
      _
    $region11: #{attention_forward.1} parent=1 // pred_check_branch
      %22 = sbr.rel (0) target = $region13
    $region12: #{attention_forward.1} parent=1 // pred_region
      _
    $region13: #{attention_forward.1} parent=1 // pred_fallthru
      _
    // Predicated region
    $region14: #{attention_forward.1} parent=1 // pred_check
      _
    $region15: #{attention_forward.1} parent=1 // pred_check_branch
      %24 = sbr.rel (0) target = $region17
    $region16: #{attention_forward.1} parent=1 // pred_region
      _
    $region17: #{attention_forward.1} parent=1 // pred_fallthru
      _
    // Predicated region
    $region18: #{attention_forward.1} parent=1 // pred_check
      _
    $region19: #{attention_forward.1} parent=1 // pred_check_branch
      %26 = sbr.rel (0) target = $region21
    $region20: #{attention_forward.1} parent=1 // pred_region
      _
    $region21: #{attention_forward.1} parent=1 // pred_fallthru
      _
    // Predicated region
    $region22: #{attention_forward.1} parent=1 // pred_check
      _
    $region23: #{attention_forward.1} parent=1 // pred_check_branch
      %28 = sbr.rel (0) target = $region25
    $region24: #{attention_forward.1} parent=1 // pred_region
      _
    $region25: #{attention_forward.1} parent=1 // pred_fallthru
      _
    // Predicated region
    $region26: #{attention_forward.1} parent=1 // pred_check
      _
    $region27: #{attention_forward.1} parent=1 // pred_check_branch
      %30 = sbr.rel (0) target = $region29
    $region28: #{attention_forward.1} parent=1 // pred_region
      _
    $region29: #{attention_forward.1} parent=1 // pred_fallthru
      _
    // Predicated region
    $region30: #{attention_forward.1} parent=1 // pred_check
      _
    $region31: #{attention_forward.1} parent=1 // pred_check_branch
      %32 = sbr.rel (0) target = $region33
    $region32: #{attention_forward.1} parent=1 // pred_region
      _
    $region33: #{attention_forward.1} parent=1 // pred_fallthru
      _
    %v33 = vld [vmem:[%s0] sm:$0x1]
    %v34 = vld [vmem:[%s0 + $0x1] sm:$0x1]
    %v35 = vld [vmem:[%s2] sm:$0xff]
    %v36 = vld [vmem:[%s2 + $0x8] sm:$0xff]
    %v37 = vld [vmem:[%s2 + $0x10] sm:$0xff]
    %v38 = vld [vmem:[%s2 + $0x18] sm:$0xff]
    %v39 = vld [vmem:[%s3] sm:$0xff]
    %v40 = vld [vmem:[%s3 + $0x8] sm:$0xff]
    %v41 = vld [vmem:[%s3 + $0x10] sm:$0x3]
    %v42 = vld [vmem:[%s3 + $0x18] sm:$0xff]
    %v43 = vld [vmem:[%s3 + $0x20] sm:$0xff]
    %v44 = vld [vmem:[%s3 + $0x28] sm:$0x3]
    %v45 = vld [vmem:[%s4] sm:$0xff]
    %v46 = vld [vmem:[%s4 + $0x8] sm:$0xff]
    %v47 = vld [vmem:[%s4 + $0x10] sm:$0x3]
    %v48 = vld [vmem:[%s4 + $0x18] sm:$0xff]
    %v49 = vld [vmem:[%s4 + $0x20] sm:$0xff]
    %v50 = vld [vmem:[%s4 + $0x28] sm:$0x3]
    %v51 = vld [vmem:[%s6] sm:$0x3f]
    %53 = vset.pattern.permute.xlu0 0
    %54 = vperm.xlu0 %53, %v39
    %v55 = vpop.permute.xlu0 %54
    %58 = vset.pattern.permute.xlu0 0
    %59 = vperm.xlu0 %58, %v40
    %v60 = vpop.permute.xlu0 %59
    %63 = vset.pattern.permute.xlu0 0
    %64 = vperm.xlu0 %63, %v42
    %v65 = vpop.permute.xlu0 %64
    %68 = vset.pattern.permute.xlu0 0
    %69 = vperm.xlu0 %68, %v43
    %v70 = vpop.permute.xlu0 %69
    %v72 = vlaneseq
    %v73 = vshrl.u32 %v72, 7
    %v74 = vsub.s32 0, %v73
    %v75 = vrot.slane %v51, %v74
    %v76 = vmul.f32 %v55, %v75
    %v77 = vmul.f32 %v60, %v75
    %v78 = vmul.f32 %v65, %v75
    %v79 = vmul.f32 %v70, %v75
    %81 = vset.pattern.permute.xlu0 0
    %82 = vperm.xlu0 %81, %v45
    %v83 = vpop.permute.xlu0 %82
    %86 = vset.pattern.permute.xlu0 0
    %87 = vperm.xlu0 %86, %v46
    %v88 = vpop.permute.xlu0 %87
    %91 = vset.pattern.permute.xlu0 0
    %92 = vperm.xlu0 %91, %v48
    %v93 = vpop.permute.xlu0 %92
    %96 = vset.pattern.permute.xlu0 0
    %97 = vperm.xlu0 %96, %v49
    %v98 = vpop.permute.xlu0 %97
    %v100 = vlaneseq
    %v101 = vshrl.u32 %v100, 7
    %v102 = vsub.s32 1, %v101
    %v103 = vrot.slane %v51, %v102
    %v104 = vmul.f32 %v83, %v103
    %v105 = vmul.f32 %v88, %v103
    %v106 = vmul.f32 %v93, %v103
    %v107 = vmul.f32 %v98, %v103
    %v108 = vadd.f32 %v76, %v104
    %v109 = vadd.f32 %v77, %v105
    %v110 = vadd.f32 %v78, %v106
    %v111 = vadd.f32 %v79, %v107
    %113 = vset.pattern.permute.xlu0 0
    %114 = vperm.xlu0 %113, %v41
    %v115 = vpop.permute.xlu0 %114
    %118 = vset.pattern.permute.xlu0 0
    %119 = vperm.xlu0 %118, %v44
    %v120 = vpop.permute.xlu0 %119
    %v122 = vlaneseq
    %v123 = vshrl.u32 %v122, 7
    %v124 = vsub.s32 2, %v123
    %v125 = vrot.slane %v51, %v124
    %v126 = vmul.f32 %v55, %v125
    %v127 = vmul.f32 %v60, %v125
    %v128 = vmul.f32 %v115, %v125
    %v129 = vmul.f32 %v65, %v125
    %v130 = vmul.f32 %v70, %v125
    %v131 = vmul.f32 %v120, %v125
    %vm138 = vcmask 1046528
    %v139 = vrot.slane %v126, 1
    %v140 = vrot.slane %v127, 1
    %v141 = vsel %vm138, %v139, %v140
    %v142 = vrot.slane %v128, 1
    %v143 = vsel %vm138, %v140, %v142
    %v144 = vrot.slane %v129, 1
    %v145 = vrot.slane %v130, 1
    %v146 = vsel %vm138, %v144, %v145
    %v147 = vrot.slane %v131, 1
    %v148 = vsel %vm138, %v145, %v147
    %v153 = vadd.f32 %v108, %v141
    %v154 = vadd.f32 %v109, %v143
    %v155 = vadd.f32 %v110, %v146
    %v156 = vadd.f32 %v111, %v148
    %158 = vset.pattern.permute.xlu0 0
    %159 = vperm.xlu0 %158, %v47
    %v160 = vpop.permute.xlu0 %159
    %163 = vset.pattern.permute.xlu0 0
    %164 = vperm.xlu0 %163, %v50
    %v165 = vpop.permute.xlu0 %164
    %v167 = vlaneseq
    %v168 = vshrl.u32 %v167, 7
    %v169 = vsub.s32 3, %v168
    %v170 = vrot.slane %v51, %v169
    %v171 = vmul.f32 %v83, %v170
    %v172 = vmul.f32 %v88, %v170
    %v173 = vmul.f32 %v160, %v170
    %v174 = vmul.f32 %v93, %v170
    %v175 = vmul.f32 %v98, %v170
    %v176 = vmul.f32 %v165, %v170
    %v183 = vrot.slane %v171, 1
    %v184 = vrot.slane %v172, 1
    %v185 = vsel %vm138, %v183, %v184
    %v186 = vrot.slane %v173, 1
    %v187 = vsel %vm138, %v184, %v186
    %v188 = vrot.slane %v174, 1
    %v189 = vrot.slane %v175, 1
    %v190 = vsel %vm138, %v188, %v189
    %v191 = vrot.slane %v176, 1
    %v192 = vsel %vm138, %v189, %v191
    %v197 = vadd.f32 %v153, %v185
    %v198 = vadd.f32 %v154, %v187
    %v199 = vadd.f32 %v155, %v190
    %v200 = vadd.f32 %v156, %v192
    %v201 = vlaneseq
    %v202 = vshrl.u32 %v201, 7
    %v203 = vsub.s32 4, %v202
    %v204 = vrot.slane %v51, %v203
    %v205 = vmul.f32 %v55, %v204
    %v206 = vmul.f32 %v60, %v204
    %v207 = vmul.f32 %v115, %v204
    %v208 = vmul.f32 %v65, %v204
    %v209 = vmul.f32 %v70, %v204
    %v210 = vmul.f32 %v120, %v204
    %vm217 = vcmask 1045504
    %v218 = vrot.slane %v205, 2
    %v219 = vrot.slane %v206, 2
    %v220 = vsel %vm217, %v218, %v219
    %v221 = vrot.slane %v207, 2
    %v222 = vsel %vm217, %v219, %v221
    %v223 = vrot.slane %v208, 2
    %v224 = vrot.slane %v209, 2
    %v225 = vsel %vm217, %v223, %v224
    %v226 = vrot.slane %v210, 2
    %v227 = vsel %vm217, %v224, %v226
    %v232 = vadd.f32 %v197, %v220
    %v233 = vadd.f32 %v198, %v222
    %v234 = vadd.f32 %v199, %v225
    %v235 = vadd.f32 %v200, %v227
    %v236 = vlaneseq
    %v237 = vshrl.u32 %v236, 7
    %v238 = vsub.s32 5, %v237
    %v239 = vrot.slane %v51, %v238
    %v240 = vmul.f32 %v83, %v239
    %v241 = vmul.f32 %v88, %v239
    %v242 = vmul.f32 %v160, %v239
    %v243 = vmul.f32 %v93, %v239
    %v244 = vmul.f32 %v98, %v239
    %v245 = vmul.f32 %v165, %v239
    %v252 = vrot.slane %v240, 2
    %v253 = vrot.slane %v241, 2
    %v254 = vsel %vm217, %v252, %v253
    %v255 = vrot.slane %v242, 2
    %v256 = vsel %vm217, %v253, %v255
    %v257 = vrot.slane %v243, 2
    %v258 = vrot.slane %v244, 2
    %v259 = vsel %vm217, %v257, %v258
    %v260 = vrot.slane %v245, 2
    %v261 = vsel %vm217, %v258, %v260
    %v266 = vadd.f32 %v232, %v254
    %v267 = vadd.f32 %v233, %v256
    %v268 = vadd.f32 %v234, %v259
    %v269 = vadd.f32 %v235, %v261
    %v272 = vlaneseq
    %v273 = vshrl.u32 %v272, 7
    %v274 = vsub.s32 0, %v273
    %v275 = vrot.slane %v33, %v274
    %v276 = vlaneseq
    %v277 = vshrl.u32 %v276, 7
    %v278 = vsub.s32 0, %v277
    %v279 = vrot.slane %v34, %v278
    %v282 = vadd.f32 %v275, %v266
    %v283 = vadd.f32 %v275, %v267
    %v284 = vadd.f32 %v279, %v268
    %v285 = vadd.f32 %v279, %v269
    %v286 = vadd.f32 %v282, %v35
    %v287 = vadd.f32 %v283, %v36
    %v288 = vadd.f32 %v284, %v37
    %v289 = vadd.f32 %v285, %v38
    %v290 = vtanh.pop %v286
    %v291 = vtanh.pop %v287
    %v292 = vtanh.pop %v288
    %v293 = vtanh.pop %v289
    %v294 = vld [vmem:[%s7] sm:$0x1]
    %v295 = vld [vmem:[%s5] sm:$0x1]
    %v296 = vld [vmem:[%s5 + $0x1] sm:$0x1]
    %vm297 = vcmask 523264
    %v299 = vsel %vm297, %v294, 0
    %v302 = vsel %vm297, %v290, 0
    %v305 = vsel %vm297, %v291, 0
    %307 = vmatprep.subr.mxu0 0.0
    %308 = vmatpush1.xpose.msra.mxu0 %v302
    %309 = vmatprep.subr.mxu0 0.0
    %310 = vmatpush1.xpose.msra.mxu0 %v305
    %311 = vmatprep.subr.mxu0 0.0
    %312 = vmatpush1.xpose.msra.mxu0 0.0
    %313 = vmatprep.subr.mxu0 0.0
    %314 = vmatpush1.xpose.msra.mxu0 0.0
    %315 = vmatprep.subr.mxu0 0.0
    %316 = vmatpush1.xpose.msra.mxu0 0.0
    %317 = vmatprep.subr.mxu0 0.0
    %318 = vmatpush1.xpose.msra.mxu0 0.0
    %319 = vmatprep.subr.mxu0 0.0
    %320 = vmatpush1.xpose.msra.mxu0 0.0
    %321 = vmatprep.subr.mxu0 0.0
    %322 = vmatpush1.xpose.msra.mxu0 0.0
    %323 = vmatprep.subr.mxu0 0.0
    %324 = vmatpush1.xpose.msra.mxu0 0.0
    %325 = vmatprep.subr.mxu0 0.0
    %326 = vmatpush1.xpose.msra.mxu0 0.0
    %327 = vmatprep.subr.mxu0 0.0
    %328 = vmatpush1.xpose.msra.mxu0 0.0
    %329 = vmatprep.subr.mxu0 0.0
    %330 = vmatpush1.xpose.msra.mxu0 0.0
    %331 = vmatprep.subr.mxu0 0.0
    %332 = vmatpush1.xpose.msra.mxu0 0.0
    %333 = vmatprep.subr.mxu0 0.0
    %334 = vmatpush1.xpose.msra.mxu0 0.0
    %335 = vmatprep.subr.mxu0 0.0
    %336 = vmatpush1.xpose.msra.mxu0 0.0
    %337 = vmatprep.subr.mxu0 0.0
    %338 = vmatpush1.xpose.msra.mxu0 0.0
    %339 = vmatprep.subr.mxu0 0.0
    %340 = vmatpush1.xpose.msra.mxu0 0.0
    %341 = vmatprep.subr.mxu0 0.0
    %342 = vmatpush1.xpose.msra.mxu0 0.0
    %343 = vmatprep.subr.mxu0 0.0
    %344 = vmatpush1.xpose.msra.mxu0 0.0
    %345 = vmatprep.subr.mxu0 0.0
    %346 = vmatpush1.xpose.msra.mxu0 0.0
    %347 = vmatprep.subr.mxu0 0.0
    %348 = vmatpush1.xpose.msra.mxu0 0.0
    %349 = vmatprep.subr.mxu0 0.0
    %350 = vmatpush1.xpose.msra.mxu0 0.0
    %351 = vmatprep.subr.mxu0 0.0
    %352 = vmatpush1.xpose.msra.mxu0 0.0
    %353 = vmatprep.subr.mxu0 0.0
    %354 = vmatpush1.xpose.msra.mxu0 0.0
    %355 = vmatprep.subr.mxu0 0.0
    %356 = vmatpush1.xpose.msra.mxu0 0.0
    %357 = vmatprep.subr.mxu0 0.0
    %358 = vmatpush1.xpose.msra.mxu0 0.0
    %359 = vmatprep.subr.mxu0 0.0
    %360 = vmatpush1.xpose.msra.mxu0 0.0
    %361 = vmatprep.subr.mxu0 0.0
    %362 = vmatpush1.xpose.msra.mxu0 0.0
    %363 = vmatprep.subr.mxu0 0.0
    %364 = vmatpush1.xpose.msra.mxu0 0.0
    %365 = vmatprep.subr.mxu0 0.0
    %366 = vmatpush1.xpose.msra.mxu0 0.0
    %367 = vmatprep.subr.mxu0 0.0
    %368 = vmatpush1.xpose.msra.mxu0 0.0
    %369 = vmatprep.subr.mxu0 0.0
    %370 = vmatpush1.xpose.msra.mxu0 0.0
    %371 = vmatprep.mubr.f32.mxu0 0.0
    %372 = vmatmul.mubr.f32.gmra.mrb[0].mxu0 %v299
    %v373 = vpop.f32.mrb[0].mxu0
    %v374 = vadd.f32 %v295, %v373
    %v375 = vpop.f32.mrb[0].mxu0
    %376 = vdwg.mxu0
    %v378 = vsel %vm297, %v292, 0
    %v381 = vsel %vm297, %v293, 0
    %383 = vmatprep.subr.mxu0 0.0
    %384 = vmatpush1.xpose.msra.mxu0 %v378
    %385 = vmatprep.subr.mxu0 0.0
    %386 = vmatpush1.xpose.msra.mxu0 %v381
    %387 = vmatprep.subr.mxu0 0.0
    %388 = vmatpush1.xpose.msra.mxu0 0.0
    %389 = vmatprep.subr.mxu0 0.0
    %390 = vmatpush1.xpose.msra.mxu0 0.0
    %391 = vmatprep.subr.mxu0 0.0
    %392 = vmatpush1.xpose.msra.mxu0 0.0
    %393 = vmatprep.subr.mxu0 0.0
    %394 = vmatpush1.xpose.msra.mxu0 0.0
    %395 = vmatprep.subr.mxu0 0.0
    %396 = vmatpush1.xpose.msra.mxu0 0.0
    %397 = vmatprep.subr.mxu0 0.0
    %398 = vmatpush1.xpose.msra.mxu0 0.0
    %399 = vmatprep.subr.mxu0 0.0
    %400 = vmatpush1.xpose.msra.mxu0 0.0
    %401 = vmatprep.subr.mxu0 0.0
    %402 = vmatpush1.xpose.msra.mxu0 0.0
    %403 = vmatprep.subr.mxu0 0.0
    %404 = vmatpush1.xpose.msra.mxu0 0.0
    %405 = vmatprep.subr.mxu0 0.0
    %406 = vmatpush1.xpose.msra.mxu0 0.0
    %407 = vmatprep.subr.mxu0 0.0
    %408 = vmatpush1.xpose.msra.mxu0 0.0
    %409 = vmatprep.subr.mxu0 0.0
    %410 = vmatpush1.xpose.msra.mxu0 0.0
    %411 = vmatprep.subr.mxu0 0.0
    %412 = vmatpush1.xpose.msra.mxu0 0.0
    %413 = vmatprep.subr.mxu0 0.0
    %414 = vmatpush1.xpose.msra.mxu0 0.0
    %415 = vmatprep.subr.mxu0 0.0
    %416 = vmatpush1.xpose.msra.mxu0 0.0
    %417 = vmatprep.subr.mxu0 0.0
    %418 = vmatpush1.xpose.msra.mxu0 0.0
    %419 = vmatprep.subr.mxu0 0.0
    %420 = vmatpush1.xpose.msra.mxu0 0.0
    %421 = vmatprep.subr.mxu0 0.0
    %422 = vmatpush1.xpose.msra.mxu0 0.0
    %423 = vmatprep.subr.mxu0 0.0
    %424 = vmatpush1.xpose.msra.mxu0 0.0
    %425 = vmatprep.subr.mxu0 0.0
    %426 = vmatpush1.xpose.msra.mxu0 0.0
    %427 = vmatprep.subr.mxu0 0.0
    %428 = vmatpush1.xpose.msra.mxu0 0.0
    %429 = vmatprep.subr.mxu0 0.0
    %430 = vmatpush1.xpose.msra.mxu0 0.0
    %431 = vmatprep.subr.mxu0 0.0
    %432 = vmatpush1.xpose.msra.mxu0 0.0
    %433 = vmatprep.subr.mxu0 0.0
    %434 = vmatpush1.xpose.msra.mxu0 0.0
    %435 = vmatprep.subr.mxu0 0.0
    %436 = vmatpush1.xpose.msra.mxu0 0.0
    %437 = vmatprep.subr.mxu0 0.0
    %438 = vmatpush1.xpose.msra.mxu0 0.0
    %439 = vmatprep.subr.mxu0 0.0
    %440 = vmatpush1.xpose.msra.mxu0 0.0
    %441 = vmatprep.subr.mxu0 0.0
    %442 = vmatpush1.xpose.msra.mxu0 0.0
    %443 = vmatprep.subr.mxu0 0.0
    %444 = vmatpush1.xpose.msra.mxu0 0.0
    %445 = vmatprep.subr.mxu0 0.0
    %446 = vmatpush1.xpose.msra.mxu0 0.0
    %447 = vmatprep.mubr.f32.mxu0 0.0
    %448 = vmatmul.mubr.f32.gmra.mrb[0].mxu0 %v299
    %v449 = vpop.f32.mrb[0].mxu0
    %v450 = vadd.f32 %v296, %v449
    %v451 = vpop.f32.mrb[0].mxu0
    %452 = vdwg.mxu0
    %vm453 = vcmask 122880
    %v454 = vsel %vm453, %v374, -inf
    %455 = vmax.xlane.f32.xlu0 %v454
    %v456 = vpop.xlane.xlu0 %455
    %v457 = vsel %vm453, %v450, -inf
    %458 = vmax.xlane.f32.xlu0 %v457
    %v459 = vpop.xlane.xlu0 %458
    %v460 = vsub.f32 %v374, %v456
    %v461 = vsub.f32 %v450, %v459
    %v462 = vmul.f32 %v460, 1.442695
    %v463 = vpow.pop %v462
    %v464 = vmul.f32 %v461, 1.442695
    %v465 = vpow.pop %v464
    %v466 = vsel %vm453, %v463, 0.0
    %467 = vadd.xlane.f32.xlu0 %v466
    %v468 = vpop.xlane.xlu0 %467
    %v469 = vsel %vm453, %v465, 0.0
    %470 = vadd.xlane.f32.xlu0 %v469
    %v471 = vpop.xlane.xlu0 %470
    %v472 = vrcp.pop %v468
    %v473 = vmul.f32 %v463, %v472
    %v474 = vrcp.pop %v471
    %v475 = vmul.f32 %v465, %v474
    %476 = vst.msk [vmem:[#allocation4] sm:$0x1] %vm453, %v473
    %477 = vst.msk [vmem:[#allocation4 + $0x1] sm:$0x1] %vm453, %v475
    %v478 = vld [vmem:[%s1] sm:$0xff]
    %v479 = vld [vmem:[%s1 + $0x8] sm:$0xff]
    %v480 = vld [vmem:[%s1 + $0x10] sm:$0xff]
    %v481 = vld [vmem:[%s1 + $0x18] sm:$0xff]
    %vm482 = vcmask 130048
    %v484 = vsel %vm482, %v473, 0
    %486 = vmatprep.subr.mxu0 0.0
    %487 = vmatpush1.msra.mxu0 %v478
    %488 = vmatprep.subr.mxu0 0.0
    %489 = vmatpush1.msra.mxu0 %v479
    %490 = vmatprep.subr.mxu0 0.0
    %491 = vmatpush1.msra.mxu0 0.0
    %492 = vmatprep.subr.mxu0 0.0
    %493 = vmatpush1.msra.mxu0 0.0
    %494 = vmatprep.subr.mxu0 0.0
    %495 = vmatpush1.msra.mxu0 0.0
    %496 = vmatprep.subr.mxu0 0.0
    %497 = vmatpush1.msra.mxu0 0.0
    %498 = vmatprep.subr.mxu0 0.0
    %499 = vmatpush1.msra.mxu0 0.0
    %500 = vmatprep.subr.mxu0 0.0
    %501 = vmatpush1.msra.mxu0 0.0
    %502 = vmatprep.subr.mxu0 0.0
    %503 = vmatpush1.msra.mxu0 0.0
    %504 = vmatprep.subr.mxu0 0.0
    %505 = vmatpush1.msra.mxu0 0.0
    %506 = vmatprep.subr.mxu0 0.0
    %507 = vmatpush1.msra.mxu0 0.0
    %508 = vmatprep.subr.mxu0 0.0
    %509 = vmatpush1.msra.mxu0 0.0
    %510 = vmatprep.subr.mxu0 0.0
    %511 = vmatpush1.msra.mxu0 0.0
    %512 = vmatprep.subr.mxu0 0.0
    %513 = vmatpush1.msra.mxu0 0.0
    %514 = vmatprep.subr.mxu0 0.0
    %515 = vmatpush1.msra.mxu0 0.0
    %516 = vmatprep.subr.mxu0 0.0
    %517 = vmatpush1.msra.mxu0 0.0
    %518 = vmatprep.subr.mxu0 0.0
    %519 = vmatpush1.msra.mxu0 0.0
    %520 = vmatprep.subr.mxu0 0.0
    %521 = vmatpush1.msra.mxu0 0.0
    %522 = vmatprep.subr.mxu0 0.0
    %523 = vmatpush1.msra.mxu0 0.0
    %524 = vmatprep.subr.mxu0 0.0
    %525 = vmatpush1.msra.mxu0 0.0
    %526 = vmatprep.subr.mxu0 0.0
    %527 = vmatpush1.msra.mxu0 0.0
    %528 = vmatprep.subr.mxu0 0.0
    %529 = vmatpush1.msra.mxu0 0.0
    %530 = vmatprep.subr.mxu0 0.0
    %531 = vmatpush1.msra.mxu0 0.0
    %532 = vmatprep.subr.mxu0 0.0
    %533 = vmatpush1.msra.mxu0 0.0
    %534 = vmatprep.subr.mxu0 0.0
    %535 = vmatpush1.msra.mxu0 0.0
    %536 = vmatprep.subr.mxu0 0.0
    %537 = vmatpush1.msra.mxu0 0.0
    %538 = vmatprep.subr.mxu0 0.0
    %539 = vmatpush1.msra.mxu0 0.0
    %540 = vmatprep.subr.mxu0 0.0
    %541 = vmatpush1.msra.mxu0 0.0
    %542 = vmatprep.subr.mxu0 0.0
    %543 = vmatpush1.msra.mxu0 0.0
    %544 = vmatprep.subr.mxu0 0.0
    %545 = vmatpush1.msra.mxu0 0.0
    %546 = vmatprep.subr.mxu0 0.0
    %547 = vmatpush1.msra.mxu0 0.0
    %548 = vmatprep.subr.mxu0 0.0
    %549 = vmatpush1.msra.mxu0 0.0
    %550 = vmatprep.mubr.f32.mxu0 0.0
    %551 = vmatmul.mubr.f32.gmra.mrb[0].mxu0 %v484
    %v552 = vpop.f32.mrb[0].mxu0
    %v553 = vadd.f32 0.0, %v552
    %v554 = vpop.f32.mrb[0].mxu0
    %555 = vdwg.mxu0
    %v557 = vsel %vm482, %v475, 0
    %559 = vmatprep.subr.mxu0 0.0
    %560 = vmatpush1.msra.mxu0 %v480
    %561 = vmatprep.subr.mxu0 0.0
    %562 = vmatpush1.msra.mxu0 %v481
    %563 = vmatprep.subr.mxu0 0.0
    %564 = vmatpush1.msra.mxu0 0.0
    %565 = vmatprep.subr.mxu0 0.0
    %566 = vmatpush1.msra.mxu0 0.0
    %567 = vmatprep.subr.mxu0 0.0
    %568 = vmatpush1.msra.mxu0 0.0
    %569 = vmatprep.subr.mxu0 0.0
    %570 = vmatpush1.msra.mxu0 0.0
    %571 = vmatprep.subr.mxu0 0.0
    %572 = vmatpush1.msra.mxu0 0.0
    %573 = vmatprep.subr.mxu0 0.0
    %574 = vmatpush1.msra.mxu0 0.0
    %575 = vmatprep.subr.mxu0 0.0
    %576 = vmatpush1.msra.mxu0 0.0
    %577 = vmatprep.subr.mxu0 0.0
    %578 = vmatpush1.msra.mxu0 0.0
    %579 = vmatprep.subr.mxu0 0.0
    %580 = vmatpush1.msra.mxu0 0.0
    %581 = vmatprep.subr.mxu0 0.0
    %582 = vmatpush1.msra.mxu0 0.0
    %583 = vmatprep.subr.mxu0 0.0
    %584 = vmatpush1.msra.mxu0 0.0
    %585 = vmatprep.subr.mxu0 0.0
    %586 = vmatpush1.msra.mxu0 0.0
    %587 = vmatprep.subr.mxu0 0.0
    %588 = vmatpush1.msra.mxu0 0.0
    %589 = vmatprep.subr.mxu0 0.0
    %590 = vmatpush1.msra.mxu0 0.0
    %591 = vmatprep.subr.mxu0 0.0
    %592 = vmatpush1.msra.mxu0 0.0
    %593 = vmatprep.subr.mxu0 0.0
    %594 = vmatpush1.msra.mxu0 0.0
    %595 = vmatprep.subr.mxu0 0.0
    %596 = vmatpush1.msra.mxu0 0.0
    %597 = vmatprep.subr.mxu0 0.0
    %598 = vmatpush1.msra.mxu0 0.0
    %599 = vmatprep.subr.mxu0 0.0
    %600 = vmatpush1.msra.mxu0 0.0
    %601 = vmatprep.subr.mxu0 0.0
    %602 = vmatpush1.msra.mxu0 0.0
    %603 = vmatprep.subr.mxu0 0.0
    %604 = vmatpush1.msra.mxu0 0.0
    %605 = vmatprep.subr.mxu0 0.0
    %606 = vmatpush1.msra.mxu0 0.0
    %607 = vmatprep.subr.mxu0 0.0
    %608 = vmatpush1.msra.mxu0 0.0
    %609 = vmatprep.subr.mxu0 0.0
    %610 = vmatpush1.msra.mxu0 0.0
    %611 = vmatprep.subr.mxu0 0.0
    %612 = vmatpush1.msra.mxu0 0.0
    %613 = vmatprep.subr.mxu0 0.0
    %614 = vmatpush1.msra.mxu0 0.0
    %615 = vmatprep.subr.mxu0 0.0
    %616 = vmatpush1.msra.mxu0 0.0
    %617 = vmatprep.subr.mxu0 0.0
    %618 = vmatpush1.msra.mxu0 0.0
    %619 = vmatprep.subr.mxu0 0.0
    %620 = vmatpush1.msra.mxu0 0.0
    %621 = vmatprep.subr.mxu0 0.0
    %622 = vmatpush1.msra.mxu0 0.0
    %623 = vmatprep.mubr.f32.mxu0 0.0
    %624 = vmatmul.mubr.f32.gmra.mrb[0].mxu0 %v557
    %v625 = vpop.f32.mrb[0].mxu0
    %v626 = vadd.f32 0.0, %v625
    %v627 = vpop.f32.mrb[0].mxu0
    %628 = vdwg.mxu0
    %vm629 = vcmask 253952
    %630 = vst.msk [vmem:[#allocation2] sm:$0x1] %vm629, %v553
    %631 = vst.msk [vmem:[#allocation2 + $0x1] sm:$0x1] %vm629, %v626
    // Predicated region
    $region34: #{attention_forward.1} parent=1 // pred_check
      _
    $region35: #{attention_forward.1} parent=1 // pred_check_branch
      %633 = sbr.rel (0) target = $region37
    $region36: #{attention_forward.1} parent=1 // pred_region
      %s635 = ssub.s32 32, 32
      %636 = vsyncadd [#allocation3], %s635
      %s637 = sshll.u32 [#allocation2], 4
      %s638 = int_to_ptr.vmem [resolvable:$true] %s637
      %643 = dma.vmem_to_hbm [thread:$0]  %s638, 32, %s8, [#allocation3], 16, 16, 1
    $region37: #{attention_forward.1} parent=1 // pred_fallthru
      _
    // Predicated region
    $region38: #{attention_forward.1} parent=1 // pred_check
      _
    $region39: #{attention_forward.1} parent=1 // pred_check_branch
      %645 = sbr.rel (0) target = $region41
    $region40: #{attention_forward.1} parent=1 // pred_region
      %s647 = ssub.s32 32, 32
      %648 = vsyncadd [#allocation5], %s647
      %s649 = sshll.u32 [#allocation4], 4
      %s650 = int_to_ptr.vmem [resolvable:$true] %s649
      %655 = dma.vmem_to_hbm [thread:$0]  %s650, 32, %s9, [#allocation5], 16, 16, 1
    $region41: #{attention_forward.1} parent=1 // pred_fallthru
      _
    // Predicated region
    $region42: #{attention_forward.1} parent=1 // pred_check
      _
    $region43: #{attention_forward.1} parent=1 // pred_check_branch
      %657 = sbr.rel (0) target = $region45
    $region44: #{attention_forward.1} parent=1 // pred_region
      %658 = dma.done [#allocation3], 32
    $region45: #{attention_forward.1} parent=1 // pred_fallthru
      _
    // Predicated region
    $region46: #{attention_forward.1} parent=1 // pred_check
      _
    $region47: #{attention_forward.1} parent=1 // pred_check_branch
      %660 = sbr.rel (0) target = $region49
    $region48: #{attention_forward.1} parent=1 // pred_region
      %661 = dma.done [#allocation5], 32
    $region49: #{attention_forward.1} parent=1 // pred_fallthru
      _
    %662 = vsyncpa [#allocation3], 1
    %663 = vsyncpa [#allocation5], 1

</llo_original>
